<compile_context>
chip_gen: v5e
topology: v5e:2x2
jax: 0.10.0
libtpu: 0.0.40
codegen_flags: <defaults>
</compile_context>

<pallas_src>
import math

import jax
import jax.numpy as jnp
from jax.experimental import pallas as pl
from jax.experimental.pallas import tpu as pltpu


def _round_up(n, m):
    return ((n + m - 1) // m) * m


def scorer_kernel(x_ref, w1_ref, b1_ref, w2_ref, b2_ref, w3_ref, b3_ref, o_ref):
    """One lane-dense batch tile, column-vector convention.

    x_ref : (D_in, TB)   input tile (batch along lanes)
    w1_ref: (H, D_in)    b1_ref: (H, 1)
    w2_ref: (H, H)       b2_ref: (H, 1)
    w3_ref: (H, 1)       b3_ref: (1, 1) in SMEM
    o_ref : (1, TB)
    """
    x = x_ref[...]                                  # (D_in, TB)
    d_in = x.shape[0]

    # ---- Layer 1: Linear(D_in, H) + ReLU ----
    if d_in == 1:
        # K=1 matmul is degenerate on the MXU -> plain VPU outer-product.
        h1 = w1_ref[...] * x + b1_ref[...]          # (H,1)*(1,TB) -> (H,TB)
    else:
        h1 = jnp.dot(w1_ref[...], x,
                     preferred_element_type=jnp.float32) + b1_ref[...]
    h1 = jnp.maximum(h1, 0.0)

    # ---- Layer 2: Linear(H, H) + ReLU  (the only real MXU matmul) ----
    h2 = jnp.dot(w2_ref[...], h1,
                 preferred_element_type=jnp.float32) + b2_ref[...]
    h2 = jnp.maximum(h2, 0.0)                       # (H, TB)

    # ---- Layer 3: Linear(H, 1) as VPU multiply + cross-sublane (XLU) reduce ----
    y = jnp.sum(h2 * w3_ref[...], axis=0, keepdims=True) + b3_ref[0, 0]  # (1, TB)

    # ---- Final squashing on lane-dense vregs (EUP tanh) ----
    o_ref[...] = 2.0 * jnp.tanh(0.01 * y)


def scorer_forward(x, params, *, tile_batch=2048):
    """x: (B, input_dim) float32 -> (B, 1) float32."""
    w1, b1, w2, b2, w3, b3 = params
    B, d_in = x.shape
    H = w1.shape[0]

    # Lane-dense batch tiling: tile must be a multiple of 128.
    tb = min(_round_up(tile_batch, 128), _round_up(max(B, 1), 128))
    B_pad = _round_up(B, tb)
    grid = (B_pad // tb,)

    # Transpose to (features, batch) and zero-pad the batch to a whole tile.
    # For d_in == 1 the transpose is a pure reshape (free in XLA).
    xt = jnp.pad(x.astype(jnp.float32).T, ((0, 0), (0, B_pad - B)))

    # Advisory cost estimate so XLA schedules around the custom call sensibly.
    flops_per_elt = 2 * d_in * H + 2 * H * H + 2 * H + 4
    cost = pl.CostEstimate(
        flops=B_pad * flops_per_elt,
        transcendentals=B_pad,
        bytes_accessed=(B_pad * (d_in + 1) * 4
                        + 4 * (H * d_in + H + H * H + H + H + 1)),
    )

    const = lambda i: (0, 0)
    out_t = pl.pallas_call(
        scorer_kernel,
        out_shape=jax.ShapeDtypeStruct((1, B_pad), jnp.float32),
        grid=grid,
        in_specs=[
            pl.BlockSpec((d_in, tb), lambda i: (0, i)),     # x: streamed per tile
            pl.BlockSpec((H, d_in), const),                 # w1 (VMEM-resident)
            pl.BlockSpec((H, 1), const),                    # b1
            pl.BlockSpec((H, H), const),                    # w2
            pl.BlockSpec((H, 1), const),                    # b2
            pl.BlockSpec((H, 1), const),                    # w3 (as column)
            pl.BlockSpec(memory_space=pltpu.MemorySpace.SMEM),  # b3 scalar
        ],
        out_specs=pl.BlockSpec((1, tb), lambda i: (0, i)),
        compiler_params=pltpu.CompilerParams(
            dimension_semantics=("parallel",),
            vmem_limit_bytes=32 * 1024 * 1024,
        ),
        cost_estimate=cost,
    )(xt, w1, b1, w2, b2, w3, b3)

    return out_t[:, :B].reshape(B, 1)


def init_scorer_params(key, input_dim=1, hidden=32):
    """torch.nn.Linear-style init: U(-1/sqrt(fan_in), +1/sqrt(fan_in)).

    Weights in torch (out, in) layout; biases as (out, 1) columns; the last
    layer's weight stored as a (hidden, 1) column; b3 as a (1, 1) scalar.
    """
    ks = jax.random.split(key, 6)

    def linear(kw, kb, fan_in, fan_out):
        bound = 1.0 / math.sqrt(fan_in)
        w = jax.random.uniform(kw, (fan_out, fan_in), jnp.float32, -bound, bound)
        b = jax.random.uniform(kb, (fan_out, 1), jnp.float32, -bound, bound)
        return w, b

    w1, b1 = linear(ks[0], ks[1], input_dim, hidden)
    w2, b2 = linear(ks[2], ks[3], hidden, hidden)
    w3_row, b3 = linear(ks[4], ks[5], hidden, 1)    # (1, hidden), (1, 1)
    w3 = w3_row.T                                   # store as (hidden, 1) column
    return (w1, b1, w2, b2, w3, b3)


def scorer_reference(x, params):
    """Pure-JAX reference (row-vector convention, matches torch forward)."""
    w1, b1, w2, b2, w3, b3 = params
    h1 = jnp.maximum(x @ w1.T + b1.T, 0.0)
    h2 = jnp.maximum(h1 @ w2.T + b2.T, 0.0)
    y = h2 @ w3 + b3
    return 2.0 * jnp.tanh(0.01 * y)


if __name__ == "__main__":
    key = jax.random.PRNGKey(0)
    k_params, k_x = jax.random.split(key)

    input_dim = 1
    batch = 8

    params = init_scorer_params(k_params, input_dim=input_dim, hidden=32)
    x = jax.random.normal(k_x, (batch, input_dim), dtype=jnp.float32)

    out = jax.block_until_ready(scorer_forward(x, params))
    ref = scorer_reference(x, params)
    assert out.shape == (batch, 1), out.shape
    assert jnp.allclose(out, ref, atol=1e-5, rtol=1e-5), (out, ref)

    # Exercise the multi-step grid + ragged-batch padding path (small tile).
    x2 = jax.random.normal(jax.random.PRNGKey(1), (1000, input_dim), dtype=jnp.float32)
    out2 = jax.block_until_ready(scorer_forward(x2, params, tile_batch=256))
    ref2 = scorer_reference(x2, params)
    assert out2.shape == (1000, 1), out2.shape
    assert jnp.allclose(out2, ref2, atol=1e-5, rtol=1e-5)

    # Exercise the default large lane-dense tile with a multi-step grid.
    x3 = jax.random.normal(jax.random.PRNGKey(2), (4500, input_dim), dtype=jnp.float32)
    out3 = jax.block_until_ready(scorer_forward(x3, params))
    ref3 = scorer_reference(x3, params)
    assert out3.shape == (4500, 1), out3.shape
    assert jnp.allclose(out3, ref3, atol=1e-5, rtol=1e-5)

    print("KERNEL_OK")
</pallas_src>

<mosaic_0001>
module attributes {stable_mosaic.version = 11 : i64} {
  func.func @scorer_kernel(%arg0: i32, %arg1: memref<1x128xf32, #tpu.memory_space<vmem>>, %arg2: memref<32x1xf32, #tpu.memory_space<vmem>>, %arg3: memref<32x1xf32, #tpu.memory_space<vmem>>, %arg4: memref<32x32xf32, #tpu.memory_space<vmem>>, %arg5: memref<32x1xf32, #tpu.memory_space<vmem>>, %arg6: memref<32x1xf32, #tpu.memory_space<vmem>>, %arg7: memref<1x1xf32, #tpu.memory_space<smem>>, %arg8: memref<1x128xf32, #tpu.memory_space<vmem>>) attributes {dimension_semantics = [#tpu.dimension_semantics<parallel>], iteration_bounds = array<i64: 1>, scalar_prefetch = 0 : i64, scratch_operands = 0 : i64, tpu.core_type = #tpu.core_type<tc>, window_params = [{transform_indices = @transform_0, window_bounds = array<i64: 1, 128>}, {pipeline_mode = #tpu.pipeline_mode<synchronous>, transform_indices = @transform_1, window_bounds = array<i64: 32, 1>}, {pipeline_mode = #tpu.pipeline_mode<synchronous>, transform_indices = @transform_2, window_bounds = array<i64: 32, 1>}, {pipeline_mode = #tpu.pipeline_mode<synchronous>, transform_indices = @transform_3, window_bounds = array<i64: 32, 32>}, {pipeline_mode = #tpu.pipeline_mode<synchronous>, transform_indices = @transform_4, window_bounds = array<i64: 32, 1>}, {pipeline_mode = #tpu.pipeline_mode<synchronous>, transform_indices = @transform_5, window_bounds = array<i64: 32, 1>}, {transform_indices = @transform_6, window_bounds = array<i64: 1, 1>}, {transform_indices = @transform_7, window_bounds = array<i64: 1, 128>}]} {
    %c0 = arith.constant 0 : index
    %c0_0 = arith.constant 0 : index
    %0 = vector.load %arg1[%c0, %c0_0] : memref<1x128xf32, #tpu.memory_space<vmem>>, vector<1x128xf32>
    %c0_1 = arith.constant 0 : index
    %c0_2 = arith.constant 0 : index
    %1 = vector.load %arg2[%c0_1, %c0_2] : memref<32x1xf32, #tpu.memory_space<vmem>>, vector<32x1xf32>
    %2 = vector.broadcast %1 : vector<32x1xf32> to vector<32x128xf32>
    %3 = vector.broadcast %0 : vector<1x128xf32> to vector<32x128xf32>
    %4 = arith.mulf %2, %3 : vector<32x128xf32>
    %c0_3 = arith.constant 0 : index
    %c0_4 = arith.constant 0 : index
    %5 = vector.load %arg3[%c0_3, %c0_4] : memref<32x1xf32, #tpu.memory_space<vmem>>, vector<32x1xf32>
    %6 = vector.broadcast %5 : vector<32x1xf32> to vector<32x128xf32>
    %7 = arith.addf %4, %6 : vector<32x128xf32>
    %cst = arith.constant 0.000000e+00 : f32
    %8 = vector.broadcast %cst : f32 to vector<32x128xf32>
    %9 = arith.maximumf %7, %8 : vector<32x128xf32>
    %c0_5 = arith.constant 0 : index
    %c0_6 = arith.constant 0 : index
    %10 = vector.load %arg4[%c0_5, %c0_6] : memref<32x32xf32, #tpu.memory_space<vmem>>, vector<32x32xf32>
    %cst_7 = arith.constant dense<0.000000e+00> : vector<32x128xf32>
    %11 = tpu.matmul %10, %9, %cst_7 {dimension_numbers = #tpu.dot_dimension_numbers<[1], [0], [0], [1], [0, 0, 1, 1], [], []>} : vector<32x32xf32>, vector<32x128xf32>, vector<32x128xf32> -> vector<32x128xf32>
    %c0_8 = arith.constant 0 : index
    %c0_9 = arith.constant 0 : index
    %12 = vector.load %arg5[%c0_8, %c0_9] : memref<32x1xf32, #tpu.memory_space<vmem>>, vector<32x1xf32>
    %13 = vector.broadcast %12 : vector<32x1xf32> to vector<32x128xf32>
    %14 = arith.addf %11, %13 : vector<32x128xf32>
    %cst_10 = arith.constant 0.000000e+00 : f32
    %15 = vector.broadcast %cst_10 : f32 to vector<32x128xf32>
    %16 = arith.maximumf %14, %15 : vector<32x128xf32>
    %c0_11 = arith.constant 0 : index
    %c0_12 = arith.constant 0 : index
    %17 = vector.load %arg6[%c0_11, %c0_12] : memref<32x1xf32, #tpu.memory_space<vmem>>, vector<32x1xf32>
    %18 = vector.broadcast %17 : vector<32x1xf32> to vector<32x128xf32>
    %19 = arith.mulf %16, %18 : vector<32x128xf32>
    %cst_13 = arith.constant dense<0.000000e+00> : vector<128xf32>
    %20 = vector.multi_reduction <add>, %19, %cst_13 [0] : vector<32x128xf32> to vector<128xf32>
    %21 = vector.shape_cast %20 : vector<128xf32> to vector<1x128xf32>
    %c0_14 = arith.constant 0 : index
    %c0_15 = arith.constant 0 : index
    %22 = memref.load %arg7[%c0_14, %c0_15] : memref<1x1xf32, #tpu.memory_space<smem>>
    %23 = vector.broadcast %22 : f32 to vector<1x128xf32>
    %24 = arith.addf %21, %23 : vector<1x128xf32>
    %cst_16 = arith.constant 0.00999999977 : f32
    %25 = vector.broadcast %cst_16 : f32 to vector<1x128xf32>
    %26 = arith.mulf %25, %24 : vector<1x128xf32>
    %27 = math.tanh %26 : vector<1x128xf32>
    %cst_17 = arith.constant 2.000000e+00 : f32
    %28 = vector.broadcast %cst_17 : f32 to vector<1x128xf32>
    %29 = arith.mulf %28, %27 : vector<1x128xf32>
    %c0_18 = arith.constant 0 : index
    %c0_19 = arith.constant 0 : index
    %30 = vector.load %arg8[%c0_18, %c0_19] : memref<1x128xf32, #tpu.memory_space<vmem>>, vector<1x128xf32>
    tpu.vector_store %arg8[%c0_18, %c0_19], %29 {strides = array<i32>} : memref<1x128xf32, #tpu.memory_space<vmem>>, vector<1x128xf32>,
    return
  }
  func.func @transform_0(%arg0: i32) -> (i32, i32) {
    %c0_i32 = arith.constant 0 : i32
    %c0_i32_0 = arith.constant 0 : i32
    return %c0_i32, %arg0 : i32, i32
  }
  func.func @transform_1(%arg0: i32) -> (i32, i32) {
    %c0_i32 = arith.constant 0 : i32
    %c0_i32_0 = arith.constant 0 : i32
    %c0_i32_1 = arith.constant 0 : i32
    return %c0_i32, %c0_i32_0 : i32, i32
  }
  func.func @transform_2(%arg0: i32) -> (i32, i32) {
    %c0_i32 = arith.constant 0 : i32
    %c0_i32_0 = arith.constant 0 : i32
    %c0_i32_1 = arith.constant 0 : i32
    return %c0_i32, %c0_i32_0 : i32, i32
  }
  func.func @transform_3(%arg0: i32) -> (i32, i32) {
    %c0_i32 = arith.constant 0 : i32
    %c0_i32_0 = arith.constant 0 : i32
    %c0_i32_1 = arith.constant 0 : i32
    return %c0_i32, %c0_i32_0 : i32, i32
  }
  func.func @transform_4(%arg0: i32) -> (i32, i32) {
    %c0_i32 = arith.constant 0 : i32
    %c0_i32_0 = arith.constant 0 : i32
    %c0_i32_1 = arith.constant 0 : i32
    return %c0_i32, %c0_i32_0 : i32, i32
  }
  func.func @transform_5(%arg0: i32) -> (i32, i32) {
    %c0_i32 = arith.constant 0 : i32
    %c0_i32_0 = arith.constant 0 : i32
    %c0_i32_1 = arith.constant 0 : i32
    return %c0_i32, %c0_i32_0 : i32, i32
  }
  func.func @transform_6(%arg0: i32) -> (i32, i32) {
    %c0_i32 = arith.constant 0 : i32
    %c0_i32_0 = arith.constant 0 : i32
    %c0_i32_1 = arith.constant 0 : i32
    return %c0_i32, %c0_i32_0 : i32, i32
  }
  func.func @transform_7(%arg0: i32) -> (i32, i32) {
    %c0_i32 = arith.constant 0 : i32
    %c0_i32_0 = arith.constant 0 : i32
    return %c0_i32, %arg0 : i32, i32
  }
}

</mosaic_0001>

<llo_original>
// kernel: tpu_custom_call.1
$region0: #{tpu_custom_call.1}
  #allocation0 [shape = 'u32[]', space=smem, size = 0x4, offset = 0x4, fixed_abs, tag = 'smem constant byte address 0x4 - core index']
  #allocation1 [shape = 'u32[72,128]{1,0:T(1,128)}', space=vmem, size = 0x9000, scoped, tag = 'internal scratch']
  #allocation2 [shape = 'f32[1,1]{1,0:T(1,128)S(6)}', space=smem, size = 0x200, scoped, tag = 'scoped memory for tpu_custom_call.1']
  %s0 = inlined_call_operand.vmem [shape: f32[1,128], index: 0, kind: input, shape index: {}]
  %s1 = inlined_call_operand.vmem [shape: f32[32,1], index: 1, kind: input, shape index: {}]
  %s2 = inlined_call_operand.vmem [shape: f32[32,1], index: 2, kind: input, shape index: {}]
  %s3 = inlined_call_operand.vmem [shape: f32[32,32], index: 3, kind: input, shape index: {}]
  %s4 = inlined_call_operand.vmem [shape: f32[32,1], index: 4, kind: input, shape index: {}]
  %s5 = inlined_call_operand.vmem [shape: f32[32,1], index: 5, kind: input, shape index: {}]
  %s6 = inlined_call_operand.<no memory space> [shape: f32[1,1], index: 6, kind: input, shape index: {}]
  %s7 = inlined_call_operand.hbm [shape: f32[1,128], index: 7, kind: output, shape index: {}]
  %s8 = sld [smem:[#allocation0]]
  $region38: #{tpu_custom_call.1} parent=0
    _
  %s10 = ssub.s32 1, %s8
  %s11 = scalar_select 0, %s10, %s8
  %12 = sst [smem:[#allocation2]] %s6
  $region1: #{tpu_custom_call.1} parent=0
    #allocation3 [shape = 'u8[512]{0}', space=vmem, size = 0x400, scoped, tag = 'output window, operand 0, single buffered']
    #allocation4 [shape = 's32[1]{0}', space=sflag, size = 0x4, scoped, tag = 'scoped memory for tpu_custom_call.1']
    %13 = vsyncpa [#allocation4], 0
    // Predicated region
    $region2: #{tpu_custom_call.1} parent=1 // pred_check
      _
    $region3: #{tpu_custom_call.1} parent=1 // pred_check_branch
      %15 = sbr.rel (0) target = $region5
    $region4: #{tpu_custom_call.1} parent=1 // pred_region
      _
    $region5: #{tpu_custom_call.1} parent=1 // pred_fallthru
      _
    // Predicated region
    $region6: #{tpu_custom_call.1} parent=1 // pred_check
      _
    $region7: #{tpu_custom_call.1} parent=1 // pred_check_branch
      %17 = sbr.rel (0) target = $region9
    $region8: #{tpu_custom_call.1} parent=1 // pred_region
      _
    $region9: #{tpu_custom_call.1} parent=1 // pred_fallthru
      _
    // Predicated region
    $region10: #{tpu_custom_call.1} parent=1 // pred_check
      _
    $region11: #{tpu_custom_call.1} parent=1 // pred_check_branch
      %19 = sbr.rel (0) target = $region13
    $region12: #{tpu_custom_call.1} parent=1 // pred_region
      _
    $region13: #{tpu_custom_call.1} parent=1 // pred_fallthru
      _
    // Predicated region
    $region14: #{tpu_custom_call.1} parent=1 // pred_check
      _
    $region15: #{tpu_custom_call.1} parent=1 // pred_check_branch
      %21 = sbr.rel (0) target = $region17
    $region16: #{tpu_custom_call.1} parent=1 // pred_region
      _
    $region17: #{tpu_custom_call.1} parent=1 // pred_fallthru
      _
    // Predicated region
    $region18: #{tpu_custom_call.1} parent=1 // pred_check
      _
    $region19: #{tpu_custom_call.1} parent=1 // pred_check_branch
      %23 = sbr.rel (0) target = $region21
    $region20: #{tpu_custom_call.1} parent=1 // pred_region
      _
    $region21: #{tpu_custom_call.1} parent=1 // pred_fallthru
      _
    // Predicated region
    $region22: #{tpu_custom_call.1} parent=1 // pred_check
      _
    $region23: #{tpu_custom_call.1} parent=1 // pred_check_branch
      %25 = sbr.rel (0) target = $region25
    $region24: #{tpu_custom_call.1} parent=1 // pred_region
      _
    $region25: #{tpu_custom_call.1} parent=1 // pred_fallthru
      _
    // Predicated region
    $region26: #{tpu_custom_call.1} parent=1 // pred_check
      _
    $region27: #{tpu_custom_call.1} parent=1 // pred_check_branch
      %27 = sbr.rel (0) target = $region29
    $region28: #{tpu_custom_call.1} parent=1 // pred_region
      _
    $region29: #{tpu_custom_call.1} parent=1 // pred_fallthru
      _
    %v28 = vld [vmem:[%s0] sm:$0x1]
    %v29 = vld [vmem:[%s1] sm:$0xff]
    %v30 = vld [vmem:[%s1 + $0x8] sm:$0xff]
    %v31 = vld [vmem:[%s1 + $0x10] sm:$0xff]
    %v32 = vld [vmem:[%s1 + $0x18] sm:$0xff]
    %34 = vset.pattern.permute.xlu0 0
    %35 = vperm.xlu0 %34, %v29
    %v36 = vpop.permute.xlu0 %35
    %39 = vset.pattern.permute.xlu0 0
    %40 = vperm.xlu0 %39, %v30
    %v41 = vpop.permute.xlu0 %40
    %44 = vset.pattern.permute.xlu0 0
    %45 = vperm.xlu0 %44, %v31
    %v46 = vpop.permute.xlu0 %45
    %49 = vset.pattern.permute.xlu0 0
    %50 = vperm.xlu0 %49, %v32
    %v51 = vpop.permute.xlu0 %50
    %v54 = vperm.slane %v28, 0
    %v56 = vmul.f32 %v36, %v54
    %v57 = vmul.f32 %v41, %v54
    %v58 = vmul.f32 %v46, %v54
    %v59 = vmul.f32 %v51, %v54
    %v60 = vld [vmem:[%s2] sm:$0xff]
    %v61 = vld [vmem:[%s2 + $0x8] sm:$0xff]
    %v62 = vld [vmem:[%s2 + $0x10] sm:$0xff]
    %v63 = vld [vmem:[%s2 + $0x18] sm:$0xff]
    %65 = vset.pattern.permute.xlu0 0
    %66 = vperm.xlu0 %65, %v60
    %v67 = vpop.permute.xlu0 %66
    %70 = vset.pattern.permute.xlu0 0
    %71 = vperm.xlu0 %70, %v61
    %v72 = vpop.permute.xlu0 %71
    %75 = vset.pattern.permute.xlu0 0
    %76 = vperm.xlu0 %75, %v62
    %v77 = vpop.permute.xlu0 %76
    %80 = vset.pattern.permute.xlu0 0
    %81 = vperm.xlu0 %80, %v63
    %v82 = vpop.permute.xlu0 %81
    %v84 = vadd.f32 %v56, %v67
    %v85 = vadd.f32 %v57, %v72
    %v86 = vadd.f32 %v58, %v77
    %v87 = vadd.f32 %v59, %v82
    %v88 = vmax.f32 %v84, 0.0
    %v89 = vmax.f32 %v85, 0.0
    %v90 = vmax.f32 %v86, 0.0
    %v91 = vmax.f32 %v87, 0.0
    %v92 = vld [vmem:[%s3] sm:$0xff]
    %v93 = vld [vmem:[%s3 + $0x8] sm:$0xff]
    %v94 = vld [vmem:[%s3 + $0x10] sm:$0xff]
    %v95 = vld [vmem:[%s3 + $0x18] sm:$0xff]
    %v96 = vld [vmem:[%s4] sm:$0xff]
    %v97 = vld [vmem:[%s4 + $0x8] sm:$0xff]
    %v98 = vld [vmem:[%s4 + $0x10] sm:$0xff]
    %v99 = vld [vmem:[%s4 + $0x18] sm:$0xff]
    %101 = vset.pattern.permute.xlu0 0
    %102 = vperm.xlu0 %101, %v96
    %v103 = vpop.permute.xlu0 %102
    %106 = vset.pattern.permute.xlu0 0
    %107 = vperm.xlu0 %106, %v97
    %v108 = vpop.permute.xlu0 %107
    %111 = vset.pattern.permute.xlu0 0
    %112 = vperm.xlu0 %111, %v98
    %v113 = vpop.permute.xlu0 %112
    %116 = vset.pattern.permute.xlu0 0
    %117 = vperm.xlu0 %116, %v99
    %v118 = vpop.permute.xlu0 %117
    %vm120 = vcmask 261120
    %v122 = vsel %vm120, %v92, 0
    %v125 = vsel %vm120, %v93, 0
    %v128 = vsel %vm120, %v94, 0
    %v131 = vsel %vm120, %v95, 0
    %133 = vmatpush.msra.mxu0 0.0
    %134 = vmatpush.msra.mxu0 0.0
    %135 = vmatpush.msra.mxu0 0.0
    %136 = vmatpush.msra.mxu0 0.0
    %137 = vmatpush.msra.mxu0 0.0
    %138 = vmatpush.msra.mxu0 0.0
    %139 = vmatpush.msra.mxu0 0.0
    %140 = vmatpush.msra.mxu0 0.0
    %141 = vmatpush.msra.mxu0 0.0
    %142 = vmatpush.msra.mxu0 0.0
    %143 = vmatpush.msra.mxu0 0.0
    %144 = vmatpush.msra.mxu0 0.0
    %145 = vmatpush.msra.mxu0 %v91
    %146 = vmatpush.msra.mxu0 %v90
    %147 = vmatpush.msra.mxu0 %v89
    %148 = vmatpush.msra.mxu0 %v88
    %149 = vmatmul.f32.gmra.mxu0 %v122
    %v150 = vpop.f32.mrf.mxu0
    %v151 = vadd.f32 %v103, %v150
    %152 = vmatmul.f32.gmra.mxu0 %v125
    %v153 = vpop.f32.mrf.mxu0
    %v154 = vadd.f32 %v108, %v153
    %155 = vmatmul.f32.gmra.mxu0 %v128
    %v156 = vpop.f32.mrf.mxu0
    %v157 = vadd.f32 %v113, %v156
    %158 = vmatmul.f32.gmra.mxu0 %v131
    %v159 = vpop.f32.mrf.mxu0
    %v160 = vadd.f32 %v118, %v159
    %161 = vdwg.mxu0
    %v162 = vmax.f32 %v151, 0.0
    %v163 = vmax.f32 %v154, 0.0
    %v164 = vmax.f32 %v157, 0.0
    %v165 = vmax.f32 %v160, 0.0
    %v166 = vld [vmem:[%s5] sm:$0xff]
    %v167 = vld [vmem:[%s5 + $0x8] sm:$0xff]
    %v168 = vld [vmem:[%s5 + $0x10] sm:$0xff]
    %v169 = vld [vmem:[%s5 + $0x18] sm:$0xff]
    %171 = vset.pattern.permute.xlu0 0
    %172 = vperm.xlu0 %171, %v166
    %v173 = vpop.permute.xlu0 %172
    %176 = vset.pattern.permute.xlu0 0
    %177 = vperm.xlu0 %176, %v167
    %v178 = vpop.permute.xlu0 %177
    %181 = vset.pattern.permute.xlu0 0
    %182 = vperm.xlu0 %181, %v168
    %v183 = vpop.permute.xlu0 %182
    %186 = vset.pattern.permute.xlu0 0
    %187 = vperm.xlu0 %186, %v169
    %v188 = vpop.permute.xlu0 %187
    %v190 = vmul.f32 %v162, %v173
    %v191 = vmul.f32 %v163, %v178
    %v192 = vmul.f32 %v164, %v183
    %v193 = vmul.f32 %v165, %v188
    %v194 = vadd.f32 %v190, %v191
    %v195 = vadd.f32 %v194, %v192
    %v196 = vadd.f32 %v195, %v193
    %v197 = vrot.slane %v196, 4
    %v198 = vadd.f32 %v196, %v197
    %v199 = vrot.slane %v198, 2
    %v200 = vadd.f32 %v198, %v199
    %v201 = vrot.slane %v200, 1
    %v202 = vadd.f32 %v200, %v201
    %s203 = sld [smem:[#allocation2]]
    %v204 = vstv %s203
    %v205 = vadd.f32 %v202, %v204
    %v206 = vmul.f32 %v205, 0.01
    %v207 = vtanh.pop %v206
    %v208 = vmul.f32 %v207, 2.0
    %209 = vst [vmem:[#allocation3] sm:$0x1] %v208
    // Predicated region
    $region30: #{tpu_custom_call.1} parent=1 // pred_check
      _
    $region31: #{tpu_custom_call.1} parent=1 // pred_check_branch
      %211 = sbr.rel (0) target = $region33
    $region32: #{tpu_custom_call.1} parent=1 // pred_region
      %213 = vsyncadd [#allocation4], 0
      %s215 = sshll.u32 [#allocation3], 4
      %s216 = int_to_ptr.vmem [resolvable:$true] %s215
      %s217 = sshll.u32 %s7, 4
      %s218 = int_to_ptr.hbm [resolvable:$true] %s217
      %220 = dma.vmem_to_hbm [thread:$0]  %s216, 16, %s218, [#allocation4]
    $region33: #{tpu_custom_call.1} parent=1 // pred_fallthru
      _
    // Predicated region
    $region34: #{tpu_custom_call.1} parent=1 // pred_check
      _
    $region35: #{tpu_custom_call.1} parent=1 // pred_check_branch
      %222 = sbr.rel (0) target = $region37
    $region36: #{tpu_custom_call.1} parent=1 // pred_region
      %224 = dma.done [#allocation4], 16
    $region37: #{tpu_custom_call.1} parent=1 // pred_fallthru
      _
    %225 = vsyncpa [#allocation4], 1

</llo_original>
